<compile_context>
chip_gen: v5e
topology: v5e:2x2
jax: 0.10.0
libtpu: 0.0.40
codegen_flags: <defaults>
</compile_context>

<pallas_src>
import math

import jax
import jax.numpy as jnp
from jax.experimental import pallas as pl
from jax.experimental.pallas import tpu as pltpu

_INV_SQRT2 = 1.0 / math.sqrt(2.0)
_SQRT_2_OVER_PI = math.sqrt(2.0 / math.pi)


def _round_up(x, m):
    return ((x + m - 1) // m) * m


def _gelu(h, approximate):
    if approximate:
        # tanh GELU (EUP slot on v6e/v7x); small precision delta vs. erf.
        return 0.5 * h * (1.0 + jnp.tanh(_SQRT_2_OVER_PI * (h + 0.044715 * h * h * h)))
    return 0.5 * h * (1.0 + jax.lax.erf(h * _INV_SQRT2))  # exact, matches F.gelu


def _vmem_capacity_bytes():
    try:
        cap = int(pltpu.get_tpu_info().vmem_capacity_bytes)
        if cap > 0:
            return cap
    except Exception:
        pass
    return 64 * 1024 * 1024  # conservative fallback: v7x per-TensorCore VMEM


def _derive_vmem_limit(need_bytes, cap_bytes):
    # Actual tile bytes + 25% slack + 4 MiB, floored at 32 MiB, and always
    # leaving >= 8 MiB of physical VMEM for Mosaic scratch / semaphores.
    limit = max(int(need_bytes * 1.25) + (4 << 20), 32 << 20)
    return int(min(limit, cap_bytes - (8 << 20)))


def _choose_row_tiling(rows, tm_target, min_tiles=1):
    """Pick (tm, rows_pad): tm multiple of 8, rows padded only to an 8-row
    quantum where possible, minimising (#row tiles, padding waste, -tm)."""
    rows8 = _round_up(rows, 8)
    tm_target = max(8, _round_up(tm_target, 8))
    hi = min(tm_target, rows8)
    best = None
    for cand in range(8, hi + 1, 8):
        rows_pad = _round_up(rows8, cand)
        tiles = rows_pad // cand
        if tiles < min_tiles and rows8 >= 8 * min_tiles:
            continue
        key = (tiles, rows_pad - rows, -cand)
        if best is None or key < best[0]:
            best = (key, cand, rows_pad)
    if best is None:
        return hi, _round_up(rows8, hi)
    return best[1], best[2]


def _pick_hidden_chunk(h):
    """In-kernel hidden sub-chunk width for the weight-resident path."""
    if h % 128 != 0 or h <= 1024:
        return h
    for hc in (1024, 512, 256, 128):
        if h % hc == 0:
            return hc
    return h


def _make_resident_kernel(compute_dtype, hc, n_chunks, approximate):
    """1-D grid over row tiles; W1/W2/b1/b2 resident in VMEM (constant index)."""

    def kernel(x_ref, w1_ref, b1_ref, w2_ref, b2_ref, o_ref):
        x = x_ref[...].astype(compute_dtype)          # cast in-kernel (no wrapper pass)
        if n_chunks == 1:
            h = jnp.dot(x, w1_ref[...], preferred_element_type=jnp.float32)
            h = h + b1_ref[...]
            g = _gelu(h, approximate).astype(compute_dtype)
            acc = jnp.dot(g, w2_ref[...], preferred_element_type=jnp.float32)
        else:
            # Sub-chunk the hidden dim so the (tm, H) f32 intermediate stays small.
            acc = jnp.zeros(o_ref.shape, jnp.float32)
            for c in range(n_chunks):                  # static unroll, bounded count
                sl = pl.ds(c * hc, hc)
                h = jnp.dot(x, w1_ref[:, sl], preferred_element_type=jnp.float32)
                h = h + b1_ref[:, sl]
                g = _gelu(h, approximate).astype(compute_dtype)
                acc = acc + jnp.dot(g, w2_ref[sl, :], preferred_element_type=jnp.float32)
        o_ref[...] = (acc + b2_ref[...]).astype(o_ref.dtype)

    return kernel


def _make_streaming_kernel(compute_dtype, use_scratch, approximate):
    """2-D grid (row tiles parallel, hidden tiles = reduction axis)."""

    def kernel(x_ref, w1_ref, b1_ref, w2_ref, b2_ref, o_ref, *scratch):
        acc_ref = scratch[0] if use_scratch else o_ref   # f32 outputs: accumulate in-place
        j = pl.program_id(1)

        @pl.when(j == 0)
        def _init():
            acc_ref[...] = jnp.zeros_like(acc_ref)

        x = x_ref[...].astype(compute_dtype)
        h = jnp.dot(x, w1_ref[...], preferred_element_type=jnp.float32) + b1_ref[...]
        g = _gelu(h, approximate).astype(compute_dtype)
        acc_ref[...] += jnp.dot(g, w2_ref[...], preferred_element_type=jnp.float32)

        @pl.when(j == pl.num_programs(1) - 1)
        def _finalize():
            if use_scratch:
                o_ref[...] = (acc_ref[...] + b2_ref[...]).astype(o_ref.dtype)
            else:
                o_ref[...] = o_ref[...] + b2_ref[...]

    return kernel


def mlp_block(x, w1, b1, w2, b2, *, tm=512, th=512, compute_dtype=jnp.bfloat16,
              approximate_gelu=False, force_streaming=False):
    """dense_2(gelu(dense_1(x))) for x: (B, N, D), w1: (D, H), b1: (H,),
    w2: (H, D), b2: (D,).

    compute_dtype is the MXU operand dtype (accumulation is always f32); use
    jnp.float32 for bit-level parity with the torch module.  Default bf16 is a
    documented precision trade-off.  approximate_gelu=True uses tanh GELU.
    """
    B, N, D = x.shape
    H = w1.shape[1]
    assert w1.shape == (D, H) and b1.shape == (H,)
    assert w2.shape == (H, D) and b2.shape == (D,)

    out_dtype = x.dtype
    rows = B * N
    rows8 = _round_up(rows, 8)

    cap = _vmem_capacity_bytes()
    c_item = jnp.dtype(compute_dtype).itemsize
    x_item = jnp.dtype(x.dtype).itemsize
    o_item = jnp.dtype(out_dtype).itemsize

    # NOTE: in a real model, cast/pad the weights once outside the step function;
    # the (cheap) per-call weight prep below keeps this wrapper self-contained.

    # ------------------ weight-resident fast path decision -------------------
    hc = _pick_hidden_chunk(H)
    n_chunks = H // hc
    tm_probe = min(max(8, _round_up(tm, 8)), rows8)
    resident_need = (
        2 * (D * H + H * D) * c_item              # W1 + W2 (budget double-buffered)
        + 2 * (H + D) * 4                         # biases (f32)
        + 2 * tm_probe * D * (x_item + o_item)    # x / out tiles, double-buffered
        + 2 * tm_probe * min(H, hc) * 4           # h / g intermediates
        + tm_probe * D * 4                        # second-matmul accumulator
    )
    use_resident = (not force_streaming) and resident_need <= int(0.6 * cap)

    if use_resident:
        # >= 2 row tiles so both v7x TensorCores get work (weights are resident,
        # so extra tiles only cost ~0.35 us of per-step overhead).
        tm_eff, rows_pad = _choose_row_tiling(rows, tm, min_tiles=2)

        x2 = x.reshape(rows, D)
        if rows_pad != rows:
            x2 = jnp.pad(x2, ((0, rows_pad - rows), (0, 0)))
        w1c = w1.astype(compute_dtype)
        w2c = w2.astype(compute_dtype)
        b1c = b1.reshape(1, H).astype(jnp.float32)
        b2c = b2.reshape(1, D).astype(jnp.float32)

        grid = (rows_pad // tm_eff,)
        kernel = _make_resident_kernel(compute_dtype, hc, n_chunks, approximate_gelu)

        cost = pl.CostEstimate(
            flops=4 * rows_pad * D * H,
            transcendentals=rows_pad * H,
            bytes_accessed=(rows_pad * D * x_item + 2 * D * H * c_item
                            + (H + D) * 4 + rows_pad * D * o_item),   # weights read once
        )
        out = pl.pallas_call(
            kernel,
            out_shape=jax.ShapeDtypeStruct((rows_pad, D), out_dtype),
            grid_spec=pltpu.PrefetchScalarGridSpec(
                num_scalar_prefetch=0,
                grid=grid,
                in_specs=[
                    pl.BlockSpec((tm_eff, D), lambda i: (i, 0)),   # x row tile
                    pl.BlockSpec((D, H), lambda i: (0, 0)),        # W1 (resident)
                    pl.BlockSpec((1, H), lambda i: (0, 0)),        # b1 (resident)
                    pl.BlockSpec((H, D), lambda i: (0, 0)),        # W2 (resident)
                    pl.BlockSpec((1, D), lambda i: (0, 0)),        # b2 (resident)
                ],
                out_specs=pl.BlockSpec((tm_eff, D), lambda i: (i, 0)),
                scratch_shapes=[],
            ),
            compiler_params=pltpu.CompilerParams(
                dimension_semantics=("parallel",),
                vmem_limit_bytes=_derive_vmem_limit(resident_need, cap),
            ),
            cost_estimate=cost,
        )(x2, w1c, b1c, w2c, b2c)
        return out[:rows, :].reshape(B, N, D)

    # -------------- streaming path: hidden dim is a reduction axis -----------
    h_pad = _round_up(H, 128)
    th_eff = 128
    for cand in range(min(max(128, _round_up(th, 128)), h_pad), 127, -128):
        if h_pad % cand == 0:
            th_eff = cand
            break
    tm_eff, rows_pad = _choose_row_tiling(rows, tm, min_tiles=1)
    use_scratch = jnp.dtype(out_dtype) != jnp.dtype(jnp.float32)

    def _stream_need(tm_e, th_e):
        return (2 * tm_e * D * x_item
                + 2 * (D * th_e + th_e * D) * c_item
                + 2 * (th_e + D) * 4
                + 2 * tm_e * D * o_item
                + (tm_e * D * 4 if use_scratch else 0)
                + 2 * tm_e * th_e * 4)               # h / g intermediates

    budget = cap - (16 << 20)
    for _ in range(8):                                # shrink tiles if VMEM-tight
        if _stream_need(tm_eff, th_eff) <= budget:
            break
        if th_eff > 128:
            th_eff = 128
        elif tm_eff > 8:
            tm_eff, rows_pad = _choose_row_tiling(rows, max(8, tm_eff // 2), min_tiles=1)
        else:
            break

    x2 = x.reshape(rows, D)
    if rows_pad != rows:
        x2 = jnp.pad(x2, ((0, rows_pad - rows), (0, 0)))
    # Zero-padding of H is exact: gelu(0)=0 and padded W2 rows are zero.
    w1p = jnp.pad(w1, ((0, 0), (0, h_pad - H))).astype(compute_dtype)
    w2p = jnp.pad(w2, ((0, h_pad - H), (0, 0))).astype(compute_dtype)
    b1p = jnp.pad(b1, (0, h_pad - H)).reshape(1, h_pad).astype(jnp.float32)
    b2p = b2.reshape(1, D).astype(jnp.float32)

    grid = (rows_pad // tm_eff, h_pad // th_eff)
    kernel = _make_streaming_kernel(compute_dtype, use_scratch, approximate_gelu)
    scratch = [pltpu.VMEM((tm_eff, D), jnp.float32)] if use_scratch else []

    cost = pl.CostEstimate(
        flops=4 * rows_pad * D * h_pad,
        transcendentals=rows_pad * h_pad,
        bytes_accessed=(rows_pad * D * x_item
                        + grid[0] * 2 * D * h_pad * c_item   # weights re-streamed / row tile
                        + grid[0] * (h_pad + D) * 4
                        + rows_pad * D * o_item),
    )
    # If profiling shows exposed DMA at hidden-step boundaries, add
    # pipeline_mode=pl.Buffered(3) to the W1/W2 BlockSpecs (one extra slab each).
    out = pl.pallas_call(
        kernel,
        out_shape=jax.ShapeDtypeStruct((rows_pad, D), out_dtype),
        grid_spec=pltpu.PrefetchScalarGridSpec(
            num_scalar_prefetch=0,
            grid=grid,
            in_specs=[
                pl.BlockSpec((tm_eff, D), lambda i, j: (i, 0)),     # x row tile
                pl.BlockSpec((D, th_eff), lambda i, j: (0, j)),     # W1 hidden slab
                pl.BlockSpec((1, th_eff), lambda i, j: (0, j)),     # b1 hidden slab
                pl.BlockSpec((th_eff, D), lambda i, j: (j, 0)),     # W2 hidden slab
                pl.BlockSpec((1, D), lambda i, j: (0, 0)),          # b2
            ],
            out_specs=pl.BlockSpec((tm_eff, D), lambda i, j: (i, 0)),
            scratch_shapes=scratch,
        ),
        compiler_params=pltpu.CompilerParams(
            dimension_semantics=("parallel", "arbitrary"),
            vmem_limit_bytes=_derive_vmem_limit(_stream_need(tm_eff, th_eff), cap),
        ),
        cost_estimate=cost,
    )(x2, w1p, b1p, w2p, b2p)
    return out[:rows, :].reshape(B, N, D)


def _reference(x, w1, b1, w2, b2):
    h = jnp.einsum("bnd,dh->bnh", x.astype(jnp.float32), w1) + b1
    g = jax.nn.gelu(h, approximate=False)
    return jnp.einsum("bnh,hd->bnd", g, w2) + b2


if __name__ == "__main__":
    # Shapes implied by the module: batch=2, seq=8, input_dim=32, hidden_dim=64.
    B, N, D, H = 2, 8, 32, 64

    key = jax.random.PRNGKey(0)
    kx, k1, k2, k3, k4 = jax.random.split(key, 5)
    x = jax.random.normal(kx, (B, N, D), dtype=jnp.float32)

    bound1 = 1.0 / math.sqrt(D)
    bound2 = 1.0 / math.sqrt(H)
    w1 = jax.random.uniform(k1, (D, H), jnp.float32, -bound1, bound1)
    b1 = jax.random.uniform(k2, (H,), jnp.float32, -bound1, bound1)
    w2 = jax.random.uniform(k3, (H, D), jnp.float32, -bound2, bound2)
    b2 = jax.random.uniform(k4, (D,), jnp.float32, -bound2, bound2)

    ref = _reference(x, w1, b1, w2, b2)

    # 1) Exact-semantics weight-resident path (f32 operands, erf GELU).
    out_f32 = jax.block_until_ready(mlp_block(x, w1, b1, w2, b2, compute_dtype=jnp.float32))
    assert out_f32.shape == (B, N, D)
    assert jnp.allclose(out_f32, ref, atol=1e-5, rtol=1e-5), "f32 resident mismatch"

    # 2) Default fast path: bf16 MXU operands, f32 accumulation.
    out_bf16 = jax.block_until_ready(mlp_block(x, w1, b1, w2, b2))
    assert out_bf16.shape == (B, N, D)
    assert jnp.allclose(out_bf16, ref, atol=5e-2, rtol=5e-2), "bf16 resident mismatch"

    # 3) Streaming (hidden-reduction) path, f32 accumulate-into-output variant.
    B2, N2, D2, H2 = 2, 16, 128, 512
    kx2, k5, k6, k7, k8 = jax.random.split(jax.random.PRNGKey(1), 5)
    x_big = jax.random.normal(kx2, (B2, N2, D2), dtype=jnp.float32)
    w1b = jax.random.uniform(k5, (D2, H2), jnp.float32, -1 / math.sqrt(D2), 1 / math.sqrt(D2))
    b1b = jax.random.uniform(k6, (H2,), jnp.float32, -1 / math.sqrt(D2), 1 / math.sqrt(D2))
    w2b = jax.random.uniform(k7, (H2, D2), jnp.float32, -1 / math.sqrt(H2), 1 / math.sqrt(H2))
    b2b = jax.random.uniform(k8, (D2,), jnp.float32, -1 / math.sqrt(H2), 1 / math.sqrt(H2))
    ref2 = _reference(x_big, w1b, b1b, w2b, b2b)

    out_stream = jax.block_until_ready(
        mlp_block(x_big, w1b, b1b, w2b, b2b, compute_dtype=jnp.float32,
                  th=128, force_streaming=True))
    assert out_stream.shape == (B2, N2, D2)
    assert jnp.allclose(out_stream, ref2, atol=2e-2, rtol=2e-2), "f32 streaming mismatch"

    # 4) Streaming path with bf16 input/output (exercises the f32 scratch accumulator).
    out_stream_bf16 = jax.block_until_ready(
        mlp_block(x_big.astype(jnp.bfloat16), w1b, b1b, w2b, b2b,
                  th=128, force_streaming=True))
    assert jnp.allclose(out_stream_bf16.astype(jnp.float32), ref2,
                        atol=8e-2, rtol=8e-2), "bf16 streaming mismatch"

    print("KERNEL_OK")
</pallas_src>

<mosaic_0001>
module attributes {stable_mosaic.version = 11 : i64} {
  func.func @kernel(%arg0: i32, %arg1: memref<8x32xf32, #tpu.memory_space<vmem>>, %arg2: memref<32x64xf32, #tpu.memory_space<vmem>>, %arg3: memref<1x64xf32, #tpu.memory_space<vmem>>, %arg4: memref<64x32xf32, #tpu.memory_space<vmem>>, %arg5: memref<1x32xf32, #tpu.memory_space<vmem>>, %arg6: memref<8x32xf32, #tpu.memory_space<vmem>>) attributes {dimension_semantics = [#tpu.dimension_semantics<parallel>], iteration_bounds = array<i64: 2>, scalar_prefetch = 0 : i64, scratch_operands = 0 : i64, tpu.core_type = #tpu.core_type<tc>, window_params = [{transform_indices = @transform_0, window_bounds = array<i64: 8, 32>}, {pipeline_mode = #tpu.pipeline_mode<synchronous>, transform_indices = @transform_1, window_bounds = array<i64: 32, 64>}, {pipeline_mode = #tpu.pipeline_mode<synchronous>, transform_indices = @transform_2, window_bounds = array<i64: 1, 64>}, {pipeline_mode = #tpu.pipeline_mode<synchronous>, transform_indices = @transform_3, window_bounds = array<i64: 64, 32>}, {pipeline_mode = #tpu.pipeline_mode<synchronous>, transform_indices = @transform_4, window_bounds = array<i64: 1, 32>}, {transform_indices = @transform_5, window_bounds = array<i64: 8, 32>}]} {
    %c0 = arith.constant 0 : index
    %c0_0 = arith.constant 0 : index
    %0 = vector.load %arg1[%c0, %c0_0] : memref<8x32xf32, #tpu.memory_space<vmem>>, vector<8x32xf32>
    %c0_1 = arith.constant 0 : index
    %c0_2 = arith.constant 0 : index
    %1 = vector.load %arg2[%c0_1, %c0_2] : memref<32x64xf32, #tpu.memory_space<vmem>>, vector<32x64xf32>
    %cst = arith.constant dense<0.000000e+00> : vector<8x64xf32>
    %2 = tpu.matmul %0, %1, %cst {dimension_numbers = #tpu.dot_dimension_numbers<[1], [0], [0], [1], [0, 0, 1, 1], [], []>} : vector<8x32xf32>, vector<32x64xf32>, vector<8x64xf32> -> vector<8x64xf32>
    %c0_3 = arith.constant 0 : index
    %c0_4 = arith.constant 0 : index
    %3 = vector.load %arg3[%c0_3, %c0_4] : memref<1x64xf32, #tpu.memory_space<vmem>>, vector<1x64xf32>
    %4 = vector.broadcast %3 : vector<1x64xf32> to vector<8x64xf32>
    %5 = arith.addf %2, %4 : vector<8x64xf32>
    %cst_5 = arith.constant 5.000000e-01 : f32
    %6 = vector.broadcast %cst_5 : f32 to vector<8x64xf32>
    %7 = arith.mulf %6, %5 : vector<8x64xf32>
    %cst_6 = arith.constant 0.707106769 : f32
    %8 = vector.broadcast %cst_6 : f32 to vector<8x64xf32>
    %9 = arith.mulf %5, %8 : vector<8x64xf32>
    %10 = math.erf %9 : vector<8x64xf32>
    %cst_7 = arith.constant 1.000000e+00 : f32
    %11 = vector.broadcast %cst_7 : f32 to vector<8x64xf32>
    %12 = arith.addf %11, %10 : vector<8x64xf32>
    %13 = arith.mulf %7, %12 : vector<8x64xf32>
    %c0_8 = arith.constant 0 : index
    %c0_9 = arith.constant 0 : index
    %14 = vector.load %arg4[%c0_8, %c0_9] : memref<64x32xf32, #tpu.memory_space<vmem>>, vector<64x32xf32>
    %cst_10 = arith.constant dense<0.000000e+00> : vector<8x32xf32>
    %15 = tpu.matmul %13, %14, %cst_10 {dimension_numbers = #tpu.dot_dimension_numbers<[1], [0], [0], [1], [0, 0, 1, 1], [], []>} : vector<8x64xf32>, vector<64x32xf32>, vector<8x32xf32> -> vector<8x32xf32>
    %c0_11 = arith.constant 0 : index
    %c0_12 = arith.constant 0 : index
    %16 = vector.load %arg5[%c0_11, %c0_12] : memref<1x32xf32, #tpu.memory_space<vmem>>, vector<1x32xf32>
    %17 = vector.broadcast %16 : vector<1x32xf32> to vector<8x32xf32>
    %18 = arith.addf %15, %17 : vector<8x32xf32>
    %c0_13 = arith.constant 0 : index
    %c0_14 = arith.constant 0 : index
    %19 = vector.load %arg6[%c0_13, %c0_14] : memref<8x32xf32, #tpu.memory_space<vmem>>, vector<8x32xf32>
    tpu.vector_store %arg6[%c0_13, %c0_14], %18 {strides = array<i32>} : memref<8x32xf32, #tpu.memory_space<vmem>>, vector<8x32xf32>,
    return
  }
  func.func @transform_0(%arg0: i32) -> (i32, i32) {
    %c0_i32 = arith.constant 0 : i32
    %c0_i32_0 = arith.constant 0 : i32
    return %arg0, %c0_i32 : i32, i32
  }
  func.func @transform_1(%arg0: i32) -> (i32, i32) {
    %c0_i32 = arith.constant 0 : i32
    %c0_i32_0 = arith.constant 0 : i32
    %c0_i32_1 = arith.constant 0 : i32
    return %c0_i32, %c0_i32_0 : i32, i32
  }
  func.func @transform_2(%arg0: i32) -> (i32, i32) {
    %c0_i32 = arith.constant 0 : i32
    %c0_i32_0 = arith.constant 0 : i32
    %c0_i32_1 = arith.constant 0 : i32
    return %c0_i32, %c0_i32_0 : i32, i32
  }
  func.func @transform_3(%arg0: i32) -> (i32, i32) {
    %c0_i32 = arith.constant 0 : i32
    %c0_i32_0 = arith.constant 0 : i32
    %c0_i32_1 = arith.constant 0 : i32
    return %c0_i32, %c0_i32_0 : i32, i32
  }
  func.func @transform_4(%arg0: i32) -> (i32, i32) {
    %c0_i32 = arith.constant 0 : i32
    %c0_i32_0 = arith.constant 0 : i32
    %c0_i32_1 = arith.constant 0 : i32
    return %c0_i32, %c0_i32_0 : i32, i32
  }
  func.func @transform_5(%arg0: i32) -> (i32, i32) {
    %c0_i32 = arith.constant 0 : i32
    %c0_i32_0 = arith.constant 0 : i32
    return %arg0, %c0_i32 : i32, i32
  }
}

</mosaic_0001>

<llo_original>
// kernel: tpu_custom_call.1
$region0: #{tpu_custom_call.1}
  #allocation0 [shape = 'u32[]', space=smem, size = 0x4, offset = 0x4, fixed_abs, tag = 'smem constant byte address 0x4 - core index']
  #allocation1 [shape = 'u32[72,128]{1,0:T(1,128)}', space=vmem, size = 0x9000, scoped, tag = 'internal scratch']
  %s0 = inlined_call_operand.vmem [shape: f32[16,32], index: 0, kind: input, shape index: {}]
  %s1 = inlined_call_operand.vmem [shape: f32[32,64], index: 1, kind: input, shape index: {}]
  %s2 = inlined_call_operand.vmem [shape: f32[1,64], index: 2, kind: input, shape index: {}]
  %s3 = inlined_call_operand.vmem [shape: f32[64,32], index: 3, kind: input, shape index: {}]
  %s4 = inlined_call_operand.vmem [shape: f32[1,32], index: 4, kind: input, shape index: {}]
  %s5 = inlined_call_operand.hbm [shape: f32[16,32], index: 5, kind: output, shape index: {}]
  %s6 = sld [smem:[#allocation0]]
  $region53: #{tpu_custom_call.1} parent=0
    _
  %s8 = ssub.s32 1, %s6
  %s9 = scalar_select 0, %s8, %s6
  $region1: #{tpu_custom_call.1} parent=0
    #allocation2 [shape = 'u8[8192]{0}', space=vmem, size = 0x2000, scoped, tag = 'output window, operand 0']
    #allocation3 [shape = 's32[2]{0}', space=sflag, size = 0x8, scoped, tag = 'scoped memory for tpu_custom_call.1']
    %10 = vsyncpa [#allocation3], 0
    %s11 = scalar_lea.sflag [#allocation3], 1
    %12 = vsyncpa %s11, 0
    loop: start=0, step=1, limit=4
    $region2: #{tpu_custom_call.1} parent=1 // loop_pre_header
      _
    $region3: #{tpu_custom_call.1} parent=1 // loop_header
      %s14 = sphi 0, %s18
      %p15 = scmp.ge.s32.totalorder %s14, 4
      %s24 = sphi 0, %s26
      %s27 = sphi 0, %s24
      %s28 = sphi 0, %s27
      %s44 = sphi 0, %s28
      %s48 = sphi 0, %s48
      %s50 = sphi 0, %s48
      %s51 = sphi 0, %s50
      %s65 = sphi 0, %s51
      %s69 = sphi 0, %s69
      %s71 = sphi 0, %s69
      %s72 = sphi 0, %s71
      %s86 = sphi 0, %s72
      %s90 = sphi 0, %s90
      %s92 = sphi 0, %s90
      %s93 = sphi 0, %s92
      %s107 = sphi 0, %s93
      %s111 = sphi 0, %s111
      %s113 = sphi 0, %s111
      %s114 = sphi 0, %s113
      %s128 = sphi 0, %s114
      %s134 = sphi 0, %s136
      %s137 = sphi 0, %s134
      %s138 = sphi 0, %s137
      %s154 = sphi 0, %s138
    $region4: #{tpu_custom_call.1} parent=1 // loop_header_branch
      %17 = sbr.rel (%p15) target = $region8
    $region5: #{tpu_custom_call.1} parent=1 // loop_body
      %s19 = ssub.s32 %s14, 1
      %s20 = ssub.s32 %s14, 2
      %s21 = sadd.s32 %s14, 1
      %s22 = ssub.s32 %s14, %s21
      %p23 = scmp.eq.s32.totalorder %s22, 0
      %s25 = sadd.s32 %s24, 1
      %s26 = scalar_select %p23, %s24, %s25
      %p29 = pneg %p23
      %p30 = scmp.eq.s32.totalorder %s14, 1
      %p31 = por %p29, %p30
      %p32 = scmp.ne.s32.totalorder %s24, %s27
      %p33 = scmp.eq.s32.totalorder %s14, 0
      %p34 = por %p32, %p33
      %p35 = scmp.ne.s32.totalorder %s24, %s27
      %p36 = scmp.eq.s32.totalorder %s19, 1
      %p37 = por %p35, %p36
      %p38 = scmp.ne.s32.totalorder %s27, %s28
      %p39 = scmp.eq.s32.totalorder %s19, 0
      %p40 = por %p38, %p39
      %p41 = scmp.ne.s32.totalorder %s27, %s28
      %p42 = scmp.eq.s32.totalorder %s20, 1
      %p43 = por %p41, %p42
      %p45 = scmp.ne.s32.totalorder %s28, %s44
      %p46 = scmp.eq.s32.totalorder %s20, 0
      %p47 = por %p45, %p46
      %s49 = sadd.s32 %s48, 1
      %p52 = scmp.eq.s32.totalorder %s14, 1
      %p53 = scmp.ne.s32.totalorder %s48, %s50
      %p54 = scmp.eq.s32.totalorder %s14, 0
      %p55 = por %p53, %p54
      %p56 = scmp.ne.s32.totalorder %s48, %s50
      %p57 = scmp.eq.s32.totalorder %s19, 1
      %p58 = por %p56, %p57
      %p59 = scmp.ne.s32.totalorder %s50, %s51
      %p60 = scmp.eq.s32.totalorder %s19, 0
      %p61 = por %p59, %p60
      %p62 = scmp.ne.s32.totalorder %s50, %s51
      %p63 = scmp.eq.s32.totalorder %s20, 1
      %p64 = por %p62, %p63
      %p66 = scmp.ne.s32.totalorder %s51, %s65
      %p67 = scmp.eq.s32.totalorder %s20, 0
      %p68 = por %p66, %p67
      %s70 = sadd.s32 %s69, 1
      %p73 = scmp.eq.s32.totalorder %s14, 1
      %p74 = scmp.ne.s32.totalorder %s69, %s71
      %p75 = scmp.eq.s32.totalorder %s14, 0
      %p76 = por %p74, %p75
      %p77 = scmp.ne.s32.totalorder %s69, %s71
      %p78 = scmp.eq.s32.totalorder %s19, 1
      %p79 = por %p77, %p78
      %p80 = scmp.ne.s32.totalorder %s71, %s72
      %p81 = scmp.eq.s32.totalorder %s19, 0
      %p82 = por %p80, %p81
      %p83 = scmp.ne.s32.totalorder %s71, %s72
      %p84 = scmp.eq.s32.totalorder %s20, 1
      %p85 = por %p83, %p84
      %p87 = scmp.ne.s32.totalorder %s72, %s86
      %p88 = scmp.eq.s32.totalorder %s20, 0
      %p89 = por %p87, %p88
      %s91 = sadd.s32 %s90, 1
      %p94 = scmp.eq.s32.totalorder %s14, 1
      %p95 = scmp.ne.s32.totalorder %s90, %s92
      %p96 = scmp.eq.s32.totalorder %s14, 0
      %p97 = por %p95, %p96
      %p98 = scmp.ne.s32.totalorder %s90, %s92
      %p99 = scmp.eq.s32.totalorder %s19, 1
      %p100 = por %p98, %p99
      %p101 = scmp.ne.s32.totalorder %s92, %s93
      %p102 = scmp.eq.s32.totalorder %s19, 0
      %p103 = por %p101, %p102
      %p104 = scmp.ne.s32.totalorder %s92, %s93
      %p105 = scmp.eq.s32.totalorder %s20, 1
      %p106 = por %p104, %p105
      %p108 = scmp.ne.s32.totalorder %s93, %s107
      %p109 = scmp.eq.s32.totalorder %s20, 0
      %p110 = por %p108, %p109
      %s112 = sadd.s32 %s111, 1
      %p115 = scmp.eq.s32.totalorder %s14, 1
      %p116 = scmp.ne.s32.totalorder %s111, %s113
      %p117 = scmp.eq.s32.totalorder %s14, 0
      %p118 = por %p116, %p117
      %p119 = scmp.ne.s32.totalorder %s111, %s113
      %p120 = scmp.eq.s32.totalorder %s19, 1
      %p121 = por %p119, %p120
      %p122 = scmp.ne.s32.totalorder %s113, %s114
      %p123 = scmp.eq.s32.totalorder %s19, 0
      %p124 = por %p122, %p123
      %p125 = scmp.ne.s32.totalorder %s113, %s114
      %p126 = scmp.eq.s32.totalorder %s20, 1
      %p127 = por %p125, %p126
      %p129 = scmp.ne.s32.totalorder %s114, %s128
      %p130 = scmp.eq.s32.totalorder %s20, 0
      %p131 = por %p129, %p130
      %s132 = ssub.s32 %s14, %s21
      %p133 = scmp.eq.s32.totalorder %s132, 0
      %s135 = sadd.s32 %s134, 1
      %s136 = scalar_select %p133, %s134, %s135
      %p139 = pneg %p133
      %p140 = scmp.eq.s32.totalorder %s14, 1
      %p141 = por %p139, %p140
      %p142 = scmp.ne.s32.totalorder %s134, %s137
      %p143 = scmp.eq.s32.totalorder %s14, 0
      %p144 = por %p142, %p143
      %p145 = scmp.ne.s32.totalorder %s134, %s137
      %p146 = scmp.eq.s32.totalorder %s19, 1
      %p147 = por %p145, %p146
      %p148 = scmp.ne.s32.totalorder %s137, %s138
      %p149 = scmp.eq.s32.totalorder %s19, 0
      %p150 = por %p148, %p149
      %p151 = scmp.ne.s32.totalorder %s137, %s138
      %p152 = scmp.eq.s32.totalorder %s20, 1
      %p153 = por %p151, %p152
      %p155 = scmp.ne.s32.totalorder %s138, %s154
      %p156 = scmp.eq.s32.totalorder %s20, 0
      %p157 = por %p155, %p156
      %p158 = scmp.le.s32.totalorder 1, %s14
      %p159 = scmp.lt.s32.totalorder %s14, 3
      %p160 = pnand %p158, %p159
      %p161 = pneg %p160
      // Predicated region
      $region9: #{tpu_custom_call.1} parent=5 // pred_check
        _
      $region10: #{tpu_custom_call.1} parent=5 // pred_check_branch
        %163 = sbr.rel (%p160) target = $region12
      $region11: #{tpu_custom_call.1} parent=5 // pred_region
        %s164 = ssub.s32 %s14, 1
        // Predicated region
        $region13: #{tpu_custom_call.1} parent=11 // pred_check
          %p165 = pneg %p61
        $region14: #{tpu_custom_call.1} parent=11 // pred_check_branch
          %167 = sbr.rel (%p165) target = $region16
        $region15: #{tpu_custom_call.1} parent=11 // pred_region
          _
        $region16: #{tpu_custom_call.1} parent=11 // pred_fallthru
          _
        // Predicated region
        $region17: #{tpu_custom_call.1} parent=11 // pred_check
          %p168 = pneg %p82
        $region18: #{tpu_custom_call.1} parent=11 // pred_check_branch
          %170 = sbr.rel (%p168) target = $region20
        $region19: #{tpu_custom_call.1} parent=11 // pred_region
          _
        $region20: #{tpu_custom_call.1} parent=11 // pred_fallthru
          _
        // Predicated region
        $region21: #{tpu_custom_call.1} parent=11 // pred_check
          %p171 = pneg %p103
        $region22: #{tpu_custom_call.1} parent=11 // pred_check_branch
          %173 = sbr.rel (%p171) target = $region24
        $region23: #{tpu_custom_call.1} parent=11 // pred_region
          _
        $region24: #{tpu_custom_call.1} parent=11 // pred_fallthru
          _
        // Predicated region
        $region25: #{tpu_custom_call.1} parent=11 // pred_check
          %p174 = pneg %p124
        $region26: #{tpu_custom_call.1} parent=11 // pred_check_branch
          %176 = sbr.rel (%p174) target = $region28
        $region27: #{tpu_custom_call.1} parent=11 // pred_region
          _
        $region28: #{tpu_custom_call.1} parent=11 // pred_fallthru
          _
      $region12: #{tpu_custom_call.1} parent=5 // pred_fallthru
        _
      %p177 = scmp.lt.s32.totalorder %s14, 2
      // Predicated region
      $region29: #{tpu_custom_call.1} parent=5 // pred_check
        %p178 = pneg %p177
      $region30: #{tpu_custom_call.1} parent=5 // pred_check_branch
        %180 = sbr.rel (%p178) target = $region32
      $region31: #{tpu_custom_call.1} parent=5 // pred_region
        // Predicated region
        $region33: #{tpu_custom_call.1} parent=31 // pred_check
          %p181 = pneg %p34
        $region34: #{tpu_custom_call.1} parent=31 // pred_check_branch
          %183 = sbr.rel (%p181) target = $region36
        $region35: #{tpu_custom_call.1} parent=31 // pred_region
          %p184 = scmp.lt.s32.totalorder %s14, 1
          %s185 = scalar_select %p184, %s14, 1
          %s186 = smul.addr %s185, 8
          %s187 = scalar_lea.vmem %s0, %s186
        $region36: #{tpu_custom_call.1} parent=31 // pred_fallthru
          _
      $region32: #{tpu_custom_call.1} parent=5 // pred_fallthru
        _
      %p188 = scmp.le.s32.totalorder 1, %s14
      %p189 = scmp.lt.s32.totalorder %s14, 3
      %p190 = pnand %p188, %p189
      %p191 = pneg %p190
      // Predicated region
      $region37: #{tpu_custom_call.1} parent=5 // pred_check
        _
      $region38: #{tpu_custom_call.1} parent=5 // pred_check_branch
        %193 = sbr.rel (%p190) target = $region40
      $region39: #{tpu_custom_call.1} parent=5 // pred_region
        %s194 = ssub.s32 %s14, 1
        %p195 = scmp.lt.s32.totalorder %s19, 1
        %s196 = scalar_select %p195, %s19, 1
        %s197 = smul.addr %s196, 8
        %s198 = scalar_lea.vmem %s0, %s197
        %p199 = pneg %p40
        %p200 = pneg %p37
        %p201 = pneg %p61
        %p202 = pneg %p58
        %p203 = pneg %p82
        %p204 = pneg %p79
        %p205 = pneg %p103
        %p206 = pneg %p100
        %p207 = pneg %p124
        %p208 = pneg %p121
        %p209 = pneg %p150
        %p210 = pneg %p147
        %s211 = sand.u32 %s137, 1
        %s212 = scalar_lea.sflag [#allocation3], %s211
        %s213 = sand.u32 %s137, 1
        %s214 = smul.addr %s213, 8
        %s215 = scalar_lea.vmem [#allocation2], %s214
        %p216 = scmp.lt.s32.totalorder %s19, 1
        %s217 = scalar_select %p216, %s19, 1
        %s218 = smul.addr %s217, 8
        %s219 = scalar_lea.vmem %s0, %s218
        %v220 = vld [vmem:[%s219] sm:$0xff]
        %v221 = vld [vmem:[%s1] sm:$0xff]
        %v222 = vld [vmem:[%s1 + $0x8] sm:$0xff]
        %v223 = vld [vmem:[%s1 + $0x10] sm:$0xff]
        %v224 = vld [vmem:[%s1 + $0x18] sm:$0xff]
        %v225 = vld [vmem:[%s2] sm:$0x1]
        %v227 = vperm.slane %v225, 0
        %vm229 = vcmask 261120
        %v231 = vsel %vm229, %v220, 0
        %233 = vmatpush.msra.mxu0 0.0
        %234 = vmatpush.msra.mxu0 0.0
        %235 = vmatpush.msra.mxu0 0.0
        %236 = vmatpush.msra.mxu0 0.0
        %237 = vmatpush.msra.mxu0 0.0
        %238 = vmatpush.msra.mxu0 0.0
        %239 = vmatpush.msra.mxu0 0.0
        %240 = vmatpush.msra.mxu0 0.0
        %241 = vmatpush.msra.mxu0 0.0
        %242 = vmatpush.msra.mxu0 0.0
        %243 = vmatpush.msra.mxu0 0.0
        %244 = vmatpush.msra.mxu0 0.0
        %245 = vmatpush.msra.mxu0 %v224
        %246 = vmatpush.msra.mxu0 %v223
        %247 = vmatpush.msra.mxu0 %v222
        %248 = vmatpush.msra.mxu0 %v221
        %249 = vmatmul.f32.gmra.mxu0 %v231
        %v250 = vpop.f32.mrf.mxu0
        %v251 = vadd.f32 %v227, %v250
        %252 = vdwg.mxu0
        %v253 = vmul.f32 %v251, 0.5
        %v254 = vmul.f32 %v251, 0.70710677
        %v255 = vmul.f32 %v254, %v254
        %v256 = vmin.f32 16.0, %v255
        %v257 = vmul.f32 %v256, 2.1237322e-06
        %v258 = vadd.f32 %v257, 0.00028619796
        %v259 = vmul.f32 %v256, %v258
        %v260 = vadd.f32 %v259, 0.0036580483
        %v261 = vmul.f32 %v256, %v260
        %v262 = vadd.f32 %v261, 0.05243302
        %v263 = vmul.f32 %v256, %v262
        %v264 = vadd.f32 %v263, 0.18741608
        %v265 = vmul.f32 %v256, %v264
        %v266 = vadd.f32 %v265, 1.1283791
        %v267 = vmul.f32 %v254, %v266
        %v268 = vmul.f32 %v256, 3.8918573e-05
        %v269 = vadd.f32 %v268, 0.001143296
        %v270 = vmul.f32 %v256, %v269
        %v271 = vadd.f32 %v270, 0.014752088
        %v272 = vmul.f32 %v256, %v271
        %v273 = vadd.f32 %v272, 0.112945676
        %v274 = vmul.f32 %v256, %v273
        %v275 = vadd.f32 %v274, 0.4994258
        %v276 = vmul.f32 %v256, %v275
        %v277 = vadd.f32 %v276, 1.0
        %v278 = vrcp.pop %v277
        %v279 = vmul.f32 %v277, %v278
        %v280 = vsub.f32 1.0, %v279
        %v281 = vmul.f32 %v278, %v280
        %v282 = vadd.f32 %v278, %v281
        %vm283 = vweird.f32 %v277
        %vm284 = vweird.f32 %v278
        %vm285 = vmor %vm283, %vm284
        %v286 = vsel %vm285, %v278, %v282
        %v287 = vand.u32 2147483647, %v277
        %vm288 = vcmp.eq.f32.partialorder %v287, 8.507059e+37
        %v289 = vand.u32 %v277, 2147483648
        %v290 = vor.u32 1.1754944e-38, %v289
        %v291 = vsel %vm288, %v290, %v286
        %v292 = vmul.f32 %v267, %v291
        %v293 = vmin.f32 %v292, 1.0
        %v294 = vmax.f32 %v293, -1.0
        %v295 = vadd.f32 %v294, 1.0
        %v296 = vmul.f32 %v253, %v295
        %v297 = vld [vmem:[%s3] sm:$0xff]
        %v298 = vld [vmem:[%s3 + $0x8] sm:$0xff]
        %v299 = vld [vmem:[%s3 + $0x10] sm:$0xff]
        %v300 = vld [vmem:[%s3 + $0x18] sm:$0xff]
        %v301 = vld [vmem:[%s3 + $0x20] sm:$0xff]
        %v302 = vld [vmem:[%s3 + $0x28] sm:$0xff]
        %v303 = vld [vmem:[%s3 + $0x30] sm:$0xff]
        %v304 = vld [vmem:[%s3 + $0x38] sm:$0xff]
        %v305 = vld [vmem:[%s4] sm:$0x1]
        %v307 = vperm.slane %v305, 0
        %vm309 = vcmask 523264
        %v311 = vsel %vm309, %v296, 0
        %313 = vmatpush.msra.mxu0 0.0
        %314 = vmatpush.msra.mxu0 0.0
        %315 = vmatpush.msra.mxu0 0.0
        %316 = vmatpush.msra.mxu0 0.0
        %317 = vmatpush.msra.mxu0 0.0
        %318 = vmatpush.msra.mxu0 0.0
        %319 = vmatpush.msra.mxu0 0.0
        %320 = vmatpush.msra.mxu0 0.0
        %321 = vmatpush.msra.mxu0 %v304
        %322 = vmatpush.msra.mxu0 %v303
        %323 = vmatpush.msra.mxu0 %v302
        %324 = vmatpush.msra.mxu0 %v301
        %325 = vmatpush.msra.mxu0 %v300
        %326 = vmatpush.msra.mxu0 %v299
        %327 = vmatpush.msra.mxu0 %v298
        %328 = vmatpush.msra.mxu0 %v297
        %329 = vmatmul.f32.gmra.mxu0 %v311
        %v330 = vpop.f32.mrf.mxu0
        %v331 = vadd.f32 %v307, %v330
        %332 = vdwg.mxu0
        %333 = vst.msk [vmem:[%s215] sm:$0xff] %vm229, %v331
        %s334 = sand.u32 %s137, 1
        %s335 = scalar_lea.sflag [#allocation3], %s334
        %s336 = sand.u32 %s137, 1
        %s337 = smul.addr %s336, 8
        %s338 = scalar_lea.vmem [#allocation2], %s337
        // Predicated region
        $region41: #{tpu_custom_call.1} parent=39 // pred_check
          %p339 = pneg %p147
        $region42: #{tpu_custom_call.1} parent=39 // pred_check_branch
          %341 = sbr.rel (%p339) target = $region44
        $region43: #{tpu_custom_call.1} parent=39 // pred_region
          %343 = vsyncadd %s335, 0
          %s344 = smul.addr %s19, 8
          %s345 = scalar_lea.hbm %s5, %s344
          %s347 = sshll.u32 %s338, 4
          %s348 = int_to_ptr.vmem [resolvable:$true] %s347
          %s349 = sshll.u32 %s345, 4
          %s350 = int_to_ptr.hbm [resolvable:$true] %s349
          %352 = dma.vmem_to_hbm [thread:$0]  %s348, 128, %s350, %s335
        $region44: #{tpu_custom_call.1} parent=39 // pred_fallthru
          _
      $region40: #{tpu_custom_call.1} parent=5 // pred_fallthru
        _
      %p353 = scmp.le.s32.totalorder 2, %s14
      // Predicated region
      $region45: #{tpu_custom_call.1} parent=5 // pred_check
        %p354 = pneg %p353
      $region46: #{tpu_custom_call.1} parent=5 // pred_check_branch
        %356 = sbr.rel (%p354) target = $region48
      $region47: #{tpu_custom_call.1} parent=5 // pred_region
        %s357 = ssub.s32 %s14, 2
        // Predicated region
        $region49: #{tpu_custom_call.1} parent=47 // pred_check
          %p358 = pneg %p153
        $region50: #{tpu_custom_call.1} parent=47 // pred_check_branch
          %360 = sbr.rel (%p358) target = $region52
        $region51: #{tpu_custom_call.1} parent=47 // pred_region
          %s361 = sand.u32 %s138, 1
          %s362 = scalar_lea.sflag [#allocation3], %s361
          %s363 = sand.u32 %s138, 1
          %s364 = smul.addr %s363, 8
          %s365 = scalar_lea.vmem [#allocation2], %s364
          %367 = dma.done %s362, 128
        $region52: #{tpu_custom_call.1} parent=47 // pred_fallthru
          _
      $region48: #{tpu_custom_call.1} parent=5 // pred_fallthru
        _
    $region6: #{tpu_custom_call.1} parent=1 // loop_footer
      %s18 = sadd.s32 1, %s14
    $region7: #{tpu_custom_call.1} parent=1 // loop_footer_branch
      %13 = sbr.rel target = $region3
    $region8: #{tpu_custom_call.1} parent=1 // loop_exit
      _
    %368 = vsyncpa [#allocation3], 1
    %s369 = scalar_lea.sflag [#allocation3], 1
    %370 = vsyncpa %s369, 1

</llo_original>
